<compile_context>
chip_gen: v7x
topology: tpu7x:2x2x1
jax: 0.10.0
libtpu: 0.0.40
codegen_flags: <defaults>
</compile_context>

<pallas_src>
import functools

import jax
import jax.numpy as jnp
from jax import lax
from jax.experimental import pallas as pl
from jax.experimental.pallas import tpu as pltpu

BN_EPS = 1e-5


def _conv_bn_kernel(w_ref, p_ref, gb_ref, t_ref, *, inv_count):
    # w_ref:  (OC, K)  f32 VMEM   flattened conv weight, k = (ic, kh, kw)
    # p_ref:  (K, P)   f32 VMEM   im2col patches, p = (n, oh, ow)
    # gb_ref: (OC, 2)  f32 VMEM   column 0 = BN gamma, column 1 = BN beta
    # t_ref:  (OC, P)  f32 VMEM   output tile (lane-dense), single store
    #
    # Conv bias is intentionally omitted: a per-channel constant added before
    # training-mode BN is removed exactly by the mean subtraction below.
    conv = jnp.dot(w_ref[...], p_ref[...], preferred_element_type=jnp.float32)

    # BatchNorm (training mode): batch statistics over (N, OH, OW) per channel,
    # biased variance.  Vectorized across channels; single centered pass.
    mean = jnp.sum(conv, axis=-1, keepdims=True) * inv_count
    cent = conv - mean
    var = jnp.sum(cent * cent, axis=-1, keepdims=True) * inv_count

    # Fold gamma into the per-channel scale (work on the (OC,1) column only),
    # then one broadcast FMA over the wide (OC,P) tile.
    scale = gb_ref[:, 0:1] * lax.rsqrt(var + BN_EPS)
    t_ref[...] = cent * scale + gb_ref[:, 1:2]

    # TODO(synk): the reference computes u = tanh(t) + x1, which is dead code
    # (t is returned) and is shape-incompatible ((1,3,3,3) + (1,3,6,6)) in
    # PyTorch; it is intentionally not reproduced here.


def _im2col(x, KH, KW):
    """x: (N, CIN, H, W) -> (CIN*KH*KW, N*OH*OW).

    Row order is (ic, kh, kw) -- matching weight.reshape(OC, CIN*KH*KW) from
    OIHW -- and column order is (n, oh, ow).  Built row-by-row so the ordering
    is explicit (the previous stacked version scrambled the KW axis).
    Runs under jit, so the ~50 tiny slices fuse into one compiled program.
    """
    N, CIN, H, W = x.shape
    OH, OW = H - KH + 1, W - KW + 1
    rows = []
    for ic in range(CIN):
        for kh in range(KH):
            for kw in range(KW):
                rows.append(
                    x[:, ic, kh:kh + OH, kw:kw + OW].reshape(1, N * OH * OW))
    return jnp.concatenate(rows, axis=0)


@jax.jit
def conv_bn_forward(x0, weight, bias, gamma, beta):
    del bias  # Cancelled exactly by the training-mode BN mean subtraction.

    N, CIN, H, W = x0.shape
    OC, _, KH, KW = weight.shape
    OH, OW = H - KH + 1, W - KW + 1
    K = CIN * KH * KW
    P = N * OH * OW

    patches = _im2col(x0, KH, KW)              # (K, P)
    w_mat = weight.reshape(OC, K)              # OIHW flatten -> k = (ic, kh, kw)
    gb = jnp.stack([gamma, beta], axis=-1)     # (OC, 2)

    kernel = functools.partial(_conv_bn_kernel, inv_count=1.0 / float(P))

    flops = 2 * OC * K * P + 8 * OC * P
    bytes_accessed = 4 * (OC * K + K * P + 2 * OC + OC * P)

    # All operands are tiny (<2 KiB each), so untiled full-array VMEM specs
    # are fine on v5e/v6e/v7x.  If N/H/W ever scale up, tile P with a
    # ('parallel',) grid instead of keeping whole-array specs.
    out = pl.pallas_call(
        kernel,
        out_shape=jax.ShapeDtypeStruct((OC, P), jnp.float32),
        in_specs=[
            pl.BlockSpec(memory_space=pltpu.MemorySpace.VMEM),  # weight (OC, K)
            pl.BlockSpec(memory_space=pltpu.MemorySpace.VMEM),  # patches (K, P)
            pl.BlockSpec(memory_space=pltpu.MemorySpace.VMEM),  # gamma/beta (OC, 2)
        ],
        out_specs=pl.BlockSpec(memory_space=pltpu.MemorySpace.VMEM),
        cost_estimate=pl.CostEstimate(flops=flops, transcendentals=OC,
                                      bytes_accessed=bytes_accessed),
    )(w_mat, patches, gb)

    # (OC, P) -> (OC, N, OH, OW) -> (N, OC, OH, OW)
    return out.reshape(OC, N, OH, OW).transpose(1, 0, 2, 3)


def _reference(x0, weight, bias, gamma, beta):
    s = lax.conv_general_dilated(
        x0, weight, window_strides=(1, 1), padding='VALID',
        dimension_numbers=('NCHW', 'OIHW', 'NCHW'))
    s = s + bias[None, :, None, None]
    mean = jnp.mean(s, axis=(0, 2, 3), keepdims=True)
    var = jnp.mean((s - mean) ** 2, axis=(0, 2, 3), keepdims=True)
    return ((s - mean) / jnp.sqrt(var + BN_EPS)
            * gamma[None, :, None, None] + beta[None, :, None, None])


if __name__ == "__main__":
    key = jax.random.PRNGKey(0)
    k_x0, k_x1, k_w, k_b = jax.random.split(key, 4)

    # Shapes implied by the module: x0, x1 ~ (1, 3, 6, 6); Conv2d(3, 3, 4).
    x0 = jax.random.uniform(k_x0, (1, 3, 6, 6), dtype=jnp.float32)
    x1 = jax.random.uniform(k_x1, (1, 3, 6, 6), dtype=jnp.float32)  # feeds dead code `u`; unused

    # Deterministic parameter init (Conv2d-style uniform bound).
    fan_in = 3 * 4 * 4
    bound = 1.0 / (fan_in ** 0.5)
    weight = jax.random.uniform(k_w, (3, 3, 4, 4), dtype=jnp.float32,
                                minval=-bound, maxval=bound)
    bias = jax.random.uniform(k_b, (3,), dtype=jnp.float32,
                              minval=-bound, maxval=bound)
    gamma = jnp.ones((3,), dtype=jnp.float32)   # BatchNorm2d default weight
    beta = jnp.zeros((3,), dtype=jnp.float32)   # BatchNorm2d default bias

    t = conv_bn_forward(x0, weight, bias, gamma, beta)
    t = jax.block_until_ready(t)

    t_ref = _reference(x0, weight, bias, gamma, beta)
    # BN normalizes by a (possibly small) per-channel std, which amplifies f32
    # rounding differences between the MXU matmul path and lax.conv; 1e-4 is
    # tight enough to catch any real layout/ordering bug (those are O(1)).
    if not jnp.allclose(t, t_ref, atol=1e-4, rtol=1e-4):
        max_err = jnp.max(jnp.abs(t - t_ref))
        raise AssertionError(
            f"Pallas kernel output mismatch vs reference (max abs err {max_err})")

    print("KERNEL_OK")
</pallas_src>

<mosaic_0001>
module attributes {stable_mosaic.version = 11 : i64} {
  func.func @_conv_bn_kernel(%arg0: memref<3x48xf32, #tpu.memory_space<vmem>>, %arg1: memref<48x9xf32, #tpu.memory_space<vmem>>, %arg2: memref<3x2xf32, #tpu.memory_space<vmem>>, %arg3: memref<3x9xf32, #tpu.memory_space<vmem>>) attributes {dimension_semantics = [], scalar_prefetch = 0 : i64, scratch_operands = 0 : i64, tpu.core_type = #tpu.core_type<tc>} {
    %c0 = arith.constant 0 : index
    %c0_0 = arith.constant 0 : index
    %0 = vector.load %arg0[%c0, %c0_0] : memref<3x48xf32, #tpu.memory_space<vmem>>, vector<3x48xf32>
    %c0_1 = arith.constant 0 : index
    %c0_2 = arith.constant 0 : index
    %1 = vector.load %arg1[%c0_1, %c0_2] : memref<48x9xf32, #tpu.memory_space<vmem>>, vector<48x9xf32>
    %cst = arith.constant dense<0.000000e+00> : vector<3x9xf32>
    %2 = tpu.matmul %0, %1, %cst {dimension_numbers = #tpu.dot_dimension_numbers<[1], [0], [0], [1], [0, 0, 1, 1], [], []>} : vector<3x48xf32>, vector<48x9xf32>, vector<3x9xf32> -> vector<3x9xf32>
    %cst_3 = arith.constant dense<0.000000e+00> : vector<3xf32>
    %3 = vector.multi_reduction <add>, %2, %cst_3 [1] : vector<3x9xf32> to vector<3xf32>
    %4 = vector.shape_cast %3 : vector<3xf32> to vector<3x1xf32>
    %cst_4 = arith.constant 0.111111112 : f32
    %5 = vector.broadcast %cst_4 : f32 to vector<3x1xf32>
    %6 = arith.mulf %4, %5 : vector<3x1xf32>
    %7 = vector.broadcast %6 : vector<3x1xf32> to vector<3x9xf32>
    %8 = arith.subf %2, %7 : vector<3x9xf32>
    %9 = arith.mulf %8, %8 : vector<3x9xf32>
    %cst_5 = arith.constant dense<0.000000e+00> : vector<3xf32>
    %10 = vector.multi_reduction <add>, %9, %cst_5 [1] : vector<3x9xf32> to vector<3xf32>
    %11 = vector.shape_cast %10 : vector<3xf32> to vector<3x1xf32>
    %cst_6 = arith.constant 0.111111112 : f32
    %12 = vector.broadcast %cst_6 : f32 to vector<3x1xf32>
    %13 = arith.mulf %11, %12 : vector<3x1xf32>
    %c0_7 = arith.constant 0 : index
    %c0_8 = arith.constant 0 : index
    %14 = vector.load %arg2[%c0_7, %c0_8] : memref<3x2xf32, #tpu.memory_space<vmem>>, vector<3x1xf32>
    %cst_9 = arith.constant 9.99999974E-6 : f32
    %15 = vector.broadcast %cst_9 : f32 to vector<3x1xf32>
    %16 = arith.addf %13, %15 : vector<3x1xf32>
    %17 = math.rsqrt %16 : vector<3x1xf32>
    %18 = arith.mulf %14, %17 : vector<3x1xf32>
    %19 = vector.broadcast %18 : vector<3x1xf32> to vector<3x9xf32>
    %20 = arith.mulf %8, %19 : vector<3x9xf32>
    %c0_10 = arith.constant 0 : index
    %c1 = arith.constant 1 : index
    %21 = vector.load %arg2[%c0_10, %c1] : memref<3x2xf32, #tpu.memory_space<vmem>>, vector<3x1xf32>
    %22 = vector.broadcast %21 : vector<3x1xf32> to vector<3x9xf32>
    %23 = arith.addf %20, %22 : vector<3x9xf32>
    %c0_11 = arith.constant 0 : index
    %c0_12 = arith.constant 0 : index
    %24 = vector.load %arg3[%c0_11, %c0_12] : memref<3x9xf32, #tpu.memory_space<vmem>>, vector<3x9xf32>
    tpu.vector_store %arg3[%c0_11, %c0_12], %23 {strides = array<i32>} : memref<3x9xf32, #tpu.memory_space<vmem>>, vector<3x9xf32>,
    return
  }
}

</mosaic_0001>

<llo_original>
// kernel: squeeze.58
$region0: #{squeeze.58}
  %s0 = inlined_call_operand.vmem [shape: f32[3,3], index: 0, kind: input, shape index: {}]
  %s1 = inlined_call_operand.vmem [shape: f32[1,9], index: 1, kind: output, shape index: {}]
  $region1: #{squeeze.58} parent=0
    #allocation0 [shape = 'u8[4096]{0}', space=vmem, size = 0x1000, scoped, tag = 'scoped mem for output reshape']
    #allocation1 [shape = 'u8[4096]{0}', space=vmem, size = 0x1000, scoped, tag = 'scoped mem for input reshape']
    %s3 = sshllo.u32 0, 4
    %v4 = vld [vmem:[%s0] sm:%s3]
    %5 = vst [vmem:[#allocation1] sm:%s3] %v4
    %v6 = vld [vmem:[#allocation1] sm:$0x1]
    %vm7 = vcmask 23552
    %8 = vst.msk [vmem:[#allocation0] sm:$0x1] %vm7, %v6
    %s9 = scalar_lea.vmem [#allocation1], 2
    %v10 = vld [vmem:[%s9] sm:$0x1]
    %11 = vrot.lane.b32.xlu0 %v10, 6
    %v12 = vpop.permute.xlu0 %11
    %vm13 = vcmask 72752
    %14 = vst.msk [vmem:[#allocation0] sm:$0x1] %vm13, %v12
    %s15 = scalar_lea.vmem [#allocation1], 1
    %v16 = vld [vmem:[%s15] sm:$0x1]
    %17 = vrot.lane.b32.xlu0 %v16, 3
    %v18 = vpop.permute.xlu0 %17
    %vm19 = vcmask 48152
    %20 = vst.msk [vmem:[#allocation0] sm:$0x1] %vm19, %v18
    %s22 = sshllo.u32 0, 1
    %v24 = vld [vmem:[#allocation0] sm:%s22]
    %s25 = sshllo.u32 0, 1
    %26 = vst [vmem:[%s1] sm:%s25] %v24

// kernel: conv_bn_forward.1
$region0: #{conv_bn_forward.1}
  #allocation0 [shape = 'u32[]', space=smem, size = 0x4, offset = 0x4, fixed_abs, tag = 'smem constant byte address 0x4 - core index']
  #allocation1 [shape = 'u32[144,128]{1,0:T(1,128)}', space=vmem, size = 0x12000, scoped, tag = 'internal scratch']
  %s0 = inlined_call_operand.vmem [shape: f32[3,48], index: 0, kind: input, shape index: {}]
  %s1 = inlined_call_operand.vmem [shape: f32[48,9], index: 1, kind: input, shape index: {}]
  %s2 = inlined_call_operand.vmem [shape: f32[3,2], index: 2, kind: input, shape index: {}]
  %s3 = inlined_call_operand.vmem [shape: f32[3,9], index: 3, kind: output, shape index: {}]
  %s4 = sld [smem:[#allocation0]]
  $region22: #{conv_bn_forward.1} parent=0
    _
  %s6 = ssub.s32 1, %s4
  %s7 = scalar_select 0, %s6, %s4
  // Predicated region
  $region2: #{conv_bn_forward.1} parent=0 // pred_check
    _
  $region3: #{conv_bn_forward.1} parent=0 // pred_check_branch
    %9 = sbr.rel (0) target = $region5
  $region4: #{conv_bn_forward.1} parent=0 // pred_region
    _
  $region5: #{conv_bn_forward.1} parent=0 // pred_fallthru
    _
  // Predicated region
  $region6: #{conv_bn_forward.1} parent=0 // pred_check
    _
  $region7: #{conv_bn_forward.1} parent=0 // pred_check_branch
    %11 = sbr.rel (0) target = $region9
  $region8: #{conv_bn_forward.1} parent=0 // pred_region
    _
  $region9: #{conv_bn_forward.1} parent=0 // pred_fallthru
    _
  // Predicated region
  $region10: #{conv_bn_forward.1} parent=0 // pred_check
    _
  $region11: #{conv_bn_forward.1} parent=0 // pred_check_branch
    %13 = sbr.rel (0) target = $region13
  $region12: #{conv_bn_forward.1} parent=0 // pred_region
    _
  $region13: #{conv_bn_forward.1} parent=0 // pred_fallthru
    _
  %v14 = vld [vmem:[%s0] sm:$0x7]
  %v15 = vld [vmem:[%s1] sm:$0xff]
  %v16 = vld [vmem:[%s1 + $0x8] sm:$0xff]
  %v17 = vld [vmem:[%s1 + $0x10] sm:$0xff]
  %v18 = vld [vmem:[%s1 + $0x18] sm:$0xff]
  %v19 = vld [vmem:[%s1 + $0x20] sm:$0xff]
  %v20 = vld [vmem:[%s1 + $0x28] sm:$0xff]
  %vm21 = vcmask 392192
  %v23 = vsel %vm21, %v14, 0
  %25 = vmatprep.subr.mxu0 0.0
  %26 = vmatpush1.msra.mxu0 %v15
  %27 = vmatprep.subr.mxu0 0.0
  %28 = vmatpush1.msra.mxu0 %v16
  %29 = vmatprep.subr.mxu0 0.0
  %30 = vmatpush1.msra.mxu0 %v17
  %31 = vmatprep.subr.mxu0 0.0
  %32 = vmatpush1.msra.mxu0 %v18
  %33 = vmatprep.subr.mxu0 0.0
  %34 = vmatpush1.msra.mxu0 %v19
  %35 = vmatprep.subr.mxu0 0.0
  %36 = vmatpush1.msra.mxu0 %v20
  %37 = vmatprep.subr.mxu0 0.0
  %38 = vmatpush1.msra.mxu0 0.0
  %39 = vmatprep.subr.mxu0 0.0
  %40 = vmatpush1.msra.mxu0 0.0
  %41 = vmatprep.subr.mxu0 0.0
  %42 = vmatpush1.msra.mxu0 0.0
  %43 = vmatprep.subr.mxu0 0.0
  %44 = vmatpush1.msra.mxu0 0.0
  %45 = vmatprep.subr.mxu0 0.0
  %46 = vmatpush1.msra.mxu0 0.0
  %47 = vmatprep.subr.mxu0 0.0
  %48 = vmatpush1.msra.mxu0 0.0
  %49 = vmatprep.subr.mxu0 0.0
  %50 = vmatpush1.msra.mxu0 0.0
  %51 = vmatprep.subr.mxu0 0.0
  %52 = vmatpush1.msra.mxu0 0.0
  %53 = vmatprep.subr.mxu0 0.0
  %54 = vmatpush1.msra.mxu0 0.0
  %55 = vmatprep.subr.mxu0 0.0
  %56 = vmatpush1.msra.mxu0 0.0
  %57 = vmatprep.subr.mxu0 0.0
  %58 = vmatpush1.msra.mxu0 0.0
  %59 = vmatprep.subr.mxu0 0.0
  %60 = vmatpush1.msra.mxu0 0.0
  %61 = vmatprep.subr.mxu0 0.0
  %62 = vmatpush1.msra.mxu0 0.0
  %63 = vmatprep.subr.mxu0 0.0
  %64 = vmatpush1.msra.mxu0 0.0
  %65 = vmatprep.subr.mxu0 0.0
  %66 = vmatpush1.msra.mxu0 0.0
  %67 = vmatprep.subr.mxu0 0.0
  %68 = vmatpush1.msra.mxu0 0.0
  %69 = vmatprep.subr.mxu0 0.0
  %70 = vmatpush1.msra.mxu0 0.0
  %71 = vmatprep.subr.mxu0 0.0
  %72 = vmatpush1.msra.mxu0 0.0
  %73 = vmatprep.subr.mxu0 0.0
  %74 = vmatpush1.msra.mxu0 0.0
  %75 = vmatprep.subr.mxu0 0.0
  %76 = vmatpush1.msra.mxu0 0.0
  %77 = vmatprep.subr.mxu0 0.0
  %78 = vmatpush1.msra.mxu0 0.0
  %79 = vmatprep.subr.mxu0 0.0
  %80 = vmatpush1.msra.mxu0 0.0
  %81 = vmatprep.subr.mxu0 0.0
  %82 = vmatpush1.msra.mxu0 0.0
  %83 = vmatprep.subr.mxu0 0.0
  %84 = vmatpush1.msra.mxu0 0.0
  %85 = vmatprep.subr.mxu0 0.0
  %86 = vmatpush1.msra.mxu0 0.0
  %87 = vmatprep.subr.mxu0 0.0
  %88 = vmatpush1.msra.mxu0 0.0
  %89 = vmatprep.mubr.f32.mxu0 0.0
  %90 = vmatmul.mubr.f32.gmra.mrb[0].mxu0 %v23
  %v91 = vpop.f32.mrb[0].mxu0
  %v92 = vadd.f32 0.0, %v91
  %v93 = vpop.f32.mrb[0].mxu0
  %94 = vdwg.mxu0
  %vm95 = vcmask 67584
  %v96 = vsel %vm95, %v92, 0.0
  %97 = vadd.xlane.f32.xlu0 %v96
  %v98 = vpop.xlane.xlu0 %97
  %v99 = vmul.f32 %v98, 0.11111111
  %v100 = vsub.f32 %v92, %v99
  %v101 = vmul.f32 %v100, %v100
  %v102 = vsel %vm95, %v101, 0.0
  %103 = vadd.xlane.f32.xlu0 %v102
  %v104 = vpop.xlane.xlu0 %103
  %v105 = vmul.f32 %v104, 0.11111111
  %v106 = vld [vmem:[%s2] sm:$0x7]
  %v107 = vadd.f32 %v105, 1e-05
  %v108 = vrsqrt.pop %v107
  %v109 = vmul.f32 %v106, %v108
  %111 = vset.pattern.permute.xlu0 0
  %112 = vperm.xlu0 %111, %v109
  %v113 = vpop.permute.xlu0 %112
  %v115 = vmul.f32 %v100, %v113
  %117 = vset.pattern.permute.xlu0 1
  %118 = vperm.xlu0 %117, %v106
  %v119 = vpop.permute.xlu0 %118
  %v121 = vadd.f32 %v115, %v119
  %122 = vst.msk [vmem:[%s3] sm:$0x7] %vm95, %v121
  // Predicated region
  $region14: #{conv_bn_forward.1} parent=0 // pred_check
    _
  $region15: #{conv_bn_forward.1} parent=0 // pred_check_branch
    %124 = sbr.rel (0) target = $region17
  $region16: #{conv_bn_forward.1} parent=0 // pred_region
    _
  $region17: #{conv_bn_forward.1} parent=0 // pred_fallthru
    _
  // Predicated region
  $region18: #{conv_bn_forward.1} parent=0 // pred_check
    _
  $region19: #{conv_bn_forward.1} parent=0 // pred_check_branch
    %126 = sbr.rel (0) target = $region21
  $region20: #{conv_bn_forward.1} parent=0 // pred_region
    _
  $region21: #{conv_bn_forward.1} parent=0 // pred_fallthru
    _

</llo_original>
